<compile_context>
chip_gen: v5e
topology: v5e:2x2
jax: 0.10.0
libtpu: 0.0.40
codegen_flags: <defaults>
</compile_context>

<pallas_src>
import functools

import jax
import jax.numpy as jnp
from jax.experimental import pallas as pl
from jax.experimental.pallas import tpu as pltpu

LANES = 128
TILE_ROWS_MAX = 1024  # (1024,128) f32 tile = 512 KiB; 2 inputs x 2 buffers = 2 MiB VMEM.


def _bce_blur_elementwise(x, y, inv_alpha):
    """Stable BCE-with-logits * alpha-blur factor, elementwise in float32."""
    # Shared exp(-|x|) for both the softplus term and the sigmoid.
    e = jnp.exp(-jnp.abs(x))
    softplus = jnp.log1p(e)                         # log(1 + exp(-|x|))
    bce = jnp.maximum(x, 0.0) - x * y + softplus    # BCEWithLogitsLoss(reduction='none')
    inv = 1.0 / (1.0 + e)
    sig = jnp.where(x >= 0.0, inv, e * inv)         # sigmoid(x)
    dx = sig - y
    alpha_factor = 1.0 - jnp.exp((dx - 1.0) * inv_alpha)
    return bce * alpha_factor


def _bce_blur_kernel(pred_ref, true_ref, out_ref, acc_ref, *,
                     inv_alpha, n_rows, tile_rows, tiles_per_split):
    t = pl.program_id(1)

    @pl.when(t == 0)
    def _init():
        acc_ref[...] = jnp.zeros_like(acc_ref)

    x = pred_ref[...].astype(jnp.float32)
    y = true_ref[...].astype(jnp.float32)
    loss = _bce_blur_elementwise(x, y, inv_alpha)

    # Zero rows past the logical end (ragged last tile / clamped duplicate slots).
    logical_tile = pl.program_id(0) * tiles_per_split + t
    row_ids = (logical_tile * tile_rows
               + jax.lax.broadcasted_iota(jnp.int32, (tile_rows, LANES), 0))
    loss = jnp.where(row_ids < n_rows, loss, 0.0)

    # Lane-preserving accumulation (pure VPU adds in steady state).
    acc_ref[...] += jnp.sum(loss, axis=0, keepdims=True)

    @pl.when(t == pl.num_programs(1) - 1)
    def _finish():
        out_ref[...] = jnp.sum(acc_ref[...]).reshape(1, 1, 1)


@functools.partial(jax.jit, static_argnames=("alpha",))
def bce_blur_with_logits_loss(pred, true, alpha=0.05):
    """Pallas TPU implementation of YOLOv3's BCEBlurWithLogitsLoss.forward."""
    assert pred.shape == true.shape
    n = pred.size
    inv_alpha = 1.0 / (float(alpha) + 1e-4)

    flat_pred = pred.reshape(-1)
    flat_true = true.reshape(-1)
    n_main = (n // LANES) * LANES
    rows = n_main // LANES

    total = jnp.float32(0.0)

    if rows > 0:
        pred2d = flat_pred[:n_main].reshape(rows, LANES)
        true2d = flat_true[:n_main].reshape(rows, LANES)

        tile_rows = min(TILE_ROWS_MAX, rows)
        num_tiles = pl.cdiv(rows, tile_rows)
        # Outer "parallel" axis so both TensorCores stream on v7x (harmless on v5e/v6e).
        num_splits = 2 if num_tiles >= 2 else 1
        tiles_per_split = pl.cdiv(num_tiles, num_splits)

        def in_map(p, t):
            # Clamp so any trailing empty slot re-reads the last tile; it is
            # fully zeroed by the in-kernel row mask, so correctness holds.
            return (jnp.minimum(p * tiles_per_split + t, num_tiles - 1), 0)

        kernel = functools.partial(
            _bce_blur_kernel,
            inv_alpha=inv_alpha,
            n_rows=rows,
            tile_rows=tile_rows,
            tiles_per_split=tiles_per_split,
        )

        partials = pl.pallas_call(
            kernel,
            out_shape=jax.ShapeDtypeStruct((num_splits, 1, 1), jnp.float32),
            grid_spec=pltpu.PrefetchScalarGridSpec(
                num_scalar_prefetch=0,
                grid=(num_splits, tiles_per_split),
                in_specs=[
                    pl.BlockSpec((tile_rows, LANES), in_map),
                    pl.BlockSpec((tile_rows, LANES), in_map),
                ],
                out_specs=pl.BlockSpec((1, 1, 1), lambda p, t: (p, 0, 0)),
                scratch_shapes=[pltpu.VMEM((1, LANES), jnp.float32)],
            ),
            compiler_params=pltpu.CompilerParams(
                dimension_semantics=("parallel", "arbitrary")),
        )(pred2d, true2d)

        total = total + jnp.sum(partials)

    tail = n - n_main
    if tail > 0:
        # TODO(synk): <128-element ragged tail is summed in plain JAX (one vreg of work).
        xt = flat_pred[n_main:].astype(jnp.float32)
        yt = flat_true[n_main:].astype(jnp.float32)
        total = total + jnp.sum(_bce_blur_elementwise(xt, yt, inv_alpha))

    return total / jnp.float32(n)


def _reference(pred, true, alpha=0.05):
    # Pure-JAX reference mirroring the PyTorch module (for verification).
    x = pred.astype(jnp.float32)
    y = true.astype(jnp.float32)
    loss = jnp.maximum(x, 0.0) - x * y + jnp.log1p(jnp.exp(-jnp.abs(x)))
    p = jax.nn.sigmoid(x)
    dx = p - y
    alpha_factor = 1.0 - jnp.exp((dx - 1.0) / (alpha + 1e-4))
    return jnp.mean(loss * alpha_factor)


if __name__ == "__main__":
    key = jax.random.PRNGKey(0)
    k_pred, k_true = jax.random.split(key)

    # Small shapes consistent with a YOLO-style per-anchor objectness map (NCHW).
    shape = (2, 4, 16, 16)
    pred = jax.random.normal(k_pred, shape, dtype=jnp.float32)
    true = (jax.random.uniform(k_true, shape) > 0.5).astype(jnp.float32)

    out = bce_blur_with_logits_loss(pred, true, alpha=0.05)
    out = jax.block_until_ready(out)

    ref = _reference(pred, true, alpha=0.05)
    assert jnp.allclose(out, ref, atol=1e-5, rtol=1e-5), (out, ref)

    print("KERNEL_OK")
</pallas_src>

<mosaic_0001>
module attributes {stable_mosaic.version = 11 : i64} {
  func.func @_bce_blur_kernel(%arg0: i32, %arg1: i32, %arg2: memref<16x128xf32, #tpu.memory_space<vmem>>, %arg3: memref<16x128xf32, #tpu.memory_space<vmem>>, %arg4: memref<1x1x1xf32, #tpu.memory_space<vmem>>, %arg5: memref<1x128xf32, #tpu.memory_space<vmem>>) attributes {dimension_semantics = [#tpu.dimension_semantics<parallel>, #tpu.dimension_semantics<arbitrary>], iteration_bounds = array<i64: 1, 1>, scalar_prefetch = 0 : i64, scratch_operands = 1 : i64, tpu.core_type = #tpu.core_type<tc>, window_params = [{transform_indices = @transform_0, window_bounds = array<i64: 16, 128>}, {transform_indices = @transform_1, window_bounds = array<i64: 16, 128>}, {transform_indices = @transform_2, window_bounds = array<i64: 1, 1, 1>}]} {
    %c0_i32 = arith.constant 0 : i32
    %0 = arith.cmpi eq, %arg1, %c0_i32 : i32
    %1 = arith.extui %0 : i1 to i32
    %c0_i32_0 = arith.constant 0 : i32
    %2 = arith.cmpi ne, %1, %c0_i32_0 : i32
    scf.if %2 {
      %cst_20 = arith.constant 0.000000e+00 : f32
      %50 = vector.broadcast %cst_20 : f32 to vector<1x128xf32>
      %c0_21 = arith.constant 0 : index
      %c0_22 = arith.constant 0 : index
      %51 = vector.load %arg5[%c0_21, %c0_22] : memref<1x128xf32, #tpu.memory_space<vmem>>, vector<1x128xf32>
      tpu.vector_store %arg5[%c0_21, %c0_22], %50 {strides = array<i32>} : memref<1x128xf32, #tpu.memory_space<vmem>>, vector<1x128xf32>,
    } else {
    }
    %c0 = arith.constant 0 : index
    %c0_1 = arith.constant 0 : index
    %3 = vector.load %arg2[%c0, %c0_1] : memref<16x128xf32, #tpu.memory_space<vmem>>, vector<16x128xf32>
    %c0_2 = arith.constant 0 : index
    %c0_3 = arith.constant 0 : index
    %4 = vector.load %arg3[%c0_2, %c0_3] : memref<16x128xf32, #tpu.memory_space<vmem>>, vector<16x128xf32>
    %5 = math.absf %3 : vector<16x128xf32>
    %cst = arith.constant 0.000000e+00 : f32
    %6 = vector.broadcast %cst : f32 to vector<16x128xf32>
    %7 = arith.subf %6, %5 : vector<16x128xf32>
    %8 = math.exp %7 : vector<16x128xf32>
    %9 = math.log1p %8 : vector<16x128xf32>
    %cst_4 = arith.constant 0.000000e+00 : f32
    %10 = vector.broadcast %cst_4 : f32 to vector<16x128xf32>
    %11 = arith.maximumf %3, %10 : vector<16x128xf32>
    %12 = arith.mulf %3, %4 : vector<16x128xf32>
    %13 = arith.subf %11, %12 : vector<16x128xf32>
    %14 = arith.addf %13, %9 : vector<16x128xf32>
    %cst_5 = arith.constant 1.000000e+00 : f32
    %15 = vector.broadcast %cst_5 : f32 to vector<16x128xf32>
    %16 = arith.addf %15, %8 : vector<16x128xf32>
    %cst_6 = arith.constant 1.000000e+00 : f32
    %17 = vector.broadcast %cst_6 : f32 to vector<16x128xf32>
    %18 = arith.divf %17, %16 : vector<16x128xf32>
    %cst_7 = arith.constant 0.000000e+00 : f32
    %19 = vector.broadcast %cst_7 : f32 to vector<16x128xf32>
    %20 = arith.cmpf oge, %3, %19 : vector<16x128xf32>
    %21 = arith.mulf %8, %18 : vector<16x128xf32>
    %22 = arith.select %20, %18, %21 : vector<16x128xi1>, vector<16x128xf32>
    %23 = arith.subf %22, %4 : vector<16x128xf32>
    %cst_8 = arith.constant 1.000000e+00 : f32
    %24 = vector.broadcast %cst_8 : f32 to vector<16x128xf32>
    %25 = arith.subf %23, %24 : vector<16x128xf32>
    %cst_9 = arith.constant 19.9600792 : f32
    %26 = vector.broadcast %cst_9 : f32 to vector<16x128xf32>
    %27 = arith.mulf %25, %26 : vector<16x128xf32>
    %28 = math.exp %27 : vector<16x128xf32>
    %cst_10 = arith.constant 1.000000e+00 : f32
    %29 = vector.broadcast %cst_10 : f32 to vector<16x128xf32>
    %30 = arith.subf %29, %28 : vector<16x128xf32>
    %31 = arith.mulf %14, %30 : vector<16x128xf32>
    %c1_i32 = arith.constant 1 : i32
    %32 = arith.muli %arg0, %c1_i32 : i32
    %33 = arith.addi %32, %arg1 : i32
    %c16_i32 = arith.constant 16 : i32
    %34 = arith.muli %33, %c16_i32 : i32
    %35 = tpu.iota {dimensions = array<i32: 0>} : vector<16x128xi32>
    %36 = vector.broadcast %34 : i32 to vector<16x128xi32>
    %37 = arith.addi %36, %35 : vector<16x128xi32>
    %c16_i32_11 = arith.constant 16 : i32
    %38 = vector.broadcast %c16_i32_11 : i32 to vector<16x128xi32>
    %39 = arith.cmpi slt, %37, %38 : vector<16x128xi32>
    %cst_12 = arith.constant 0.000000e+00 : f32
    %40 = vector.broadcast %cst_12 : f32 to vector<16x128xf32>
    %41 = arith.select %39, %31, %40 : vector<16x128xi1>, vector<16x128xf32>
    %c0_13 = arith.constant 0 : index
    %c0_14 = arith.constant 0 : index
    %42 = vector.load %arg5[%c0_13, %c0_14] : memref<1x128xf32, #tpu.memory_space<vmem>>, vector<1x128xf32>
    %cst_15 = arith.constant dense<0.000000e+00> : vector<128xf32>
    %43 = vector.multi_reduction <add>, %41, %cst_15 [0] : vector<16x128xf32> to vector<128xf32>
    %44 = vector.shape_cast %43 : vector<128xf32> to vector<1x128xf32>
    %45 = arith.addf %42, %44 : vector<1x128xf32>
    %c0_16 = arith.constant 0 : index
    %c0_17 = arith.constant 0 : index
    %46 = vector.load %arg5[%c0_16, %c0_17] : memref<1x128xf32, #tpu.memory_space<vmem>>, vector<1x128xf32>
    tpu.vector_store %arg5[%c0_16, %c0_17], %45 {strides = array<i32>} : memref<1x128xf32, #tpu.memory_space<vmem>>, vector<1x128xf32>,
    %c0_i32_18 = arith.constant 0 : i32
    %47 = arith.cmpi eq, %arg1, %c0_i32_18 : i32
    %48 = arith.extui %47 : i1 to i32
    %c0_i32_19 = arith.constant 0 : i32
    %49 = arith.cmpi ne, %48, %c0_i32_19 : i32
    scf.if %49 {
      %c0_20 = arith.constant 0 : index
      %c0_21 = arith.constant 0 : index
      %50 = vector.load %arg5[%c0_20, %c0_21] : memref<1x128xf32, #tpu.memory_space<vmem>>, vector<1x128xf32>
      %51 = vector.shape_cast %50 : vector<1x128xf32> to vector<1x1x128xf32>
      %cst_22 = arith.constant dense<0.000000e+00> : vector<1xf32>
      %52 = vector.multi_reduction <add>, %51, %cst_22 [1, 2] : vector<1x1x128xf32> to vector<1xf32>
      %53 = vector.shape_cast %52 : vector<1xf32> to vector<1x1x1xf32>
      %54 = vector.extract %53[0, 0, 0] : f32 from vector<1x1x1xf32>
      %55 = vector.broadcast %54 : f32 to vector<1x1x1xf32>
      %c0_23 = arith.constant 0 : index
      %c0_24 = arith.constant 0 : index
      %c0_25 = arith.constant 0 : index
      %56 = vector.load %arg4[%c0_23, %c0_24, %c0_25] : memref<1x1x1xf32, #tpu.memory_space<vmem>>, vector<1x1x1xf32>
      tpu.vector_store %arg4[%c0_23, %c0_24, %c0_25], %55 {strides = array<i32>} : memref<1x1x1xf32, #tpu.memory_space<vmem>>, vector<1x1x1xf32>,
    } else {
    }
    return
  }
  func.func @transform_0(%arg0: i32, %arg1: i32) -> (i32, i32) {
    %c1_i32 = arith.constant 1 : i32
    %0 = arith.muli %arg0, %c1_i32 : i32
    %1 = arith.addi %0, %arg1 : i32
    %c0_i32 = arith.constant 0 : i32
    %2 = arith.minsi %1, %c0_i32 : i32
    %c0_i32_0 = arith.constant 0 : i32
    %c0_i32_1 = arith.constant 0 : i32
    return %2, %c0_i32_0 : i32, i32
  }
  func.func @transform_1(%arg0: i32, %arg1: i32) -> (i32, i32) {
    %c1_i32 = arith.constant 1 : i32
    %0 = arith.muli %arg0, %c1_i32 : i32
    %1 = arith.addi %0, %arg1 : i32
    %c0_i32 = arith.constant 0 : i32
    %2 = arith.minsi %1, %c0_i32 : i32
    %c0_i32_0 = arith.constant 0 : i32
    %c0_i32_1 = arith.constant 0 : i32
    return %2, %c0_i32_0 : i32, i32
  }
  func.func @transform_2(%arg0: i32, %arg1: i32) -> (i32, i32, i32) {
    %c0_i32 = arith.constant 0 : i32
    %c0_i32_0 = arith.constant 0 : i32
    %c0_i32_1 = arith.constant 0 : i32
    return %arg0, %c0_i32, %c0_i32_0 : i32, i32, i32
  }
}

</mosaic_0001>

<llo_original>
// kernel: bce_blur_with_logits_loss.1
$region0: #{bce_blur_with_logits_loss.1}
  #allocation0 [shape = 'u32[]', space=smem, size = 0x4, offset = 0x4, fixed_abs, tag = 'smem constant byte address 0x4 - core index']
  #allocation1 [shape = 'u32[72,128]{1,0:T(1,128)}', space=vmem, size = 0x9000, scoped, tag = 'internal scratch']
  #allocation2 [shape = 'f32[1,128]{1,0:T(1,128)}', space=vmem, size = 0x200, scoped, tag = 'scratch operand']
  %s0 = inlined_call_operand.vmem [shape: f32[16,128], index: 0, kind: input, shape index: {}]
  %s1 = inlined_call_operand.vmem [shape: f32[16,128], index: 1, kind: input, shape index: {}]
  %s2 = inlined_call_operand.hbm [shape: f32[1,1,1], index: 2, kind: output, shape index: {}]
  %s3 = sld [smem:[#allocation0]]
  $region26: #{bce_blur_with_logits_loss.1} parent=0
    _
  %s5 = ssub.s32 1, %s3
  %s6 = scalar_select 0, %s5, %s3
  $region1: #{bce_blur_with_logits_loss.1} parent=0
    #allocation3 [shape = 'u8[512]{0}', space=vmem, size = 0x400, scoped, tag = 'output window, operand 0, single buffered']
    #allocation4 [shape = 's32[1]{0}', space=sflag, size = 0x4, scoped, tag = 'scoped memory for bce_blur_with_logits_loss.1']
    %7 = vsyncpa [#allocation4], 0
    // Predicated region
    $region2: #{bce_blur_with_logits_loss.1} parent=1 // pred_check
      _
    $region3: #{bce_blur_with_logits_loss.1} parent=1 // pred_check_branch
      %9 = sbr.rel (0) target = $region5
    $region4: #{bce_blur_with_logits_loss.1} parent=1 // pred_region
      %s10 = sadd.s32 0, 0
      %p11 = scmp.lt.s32.totalorder %s10, 0
      %s12 = scalar_select %p11, %s10, 0
      %s13 = smul.u32 2, %s12
      %p14 = scmp.lt.s32.totalorder %s13, 1
      %s15 = scalar_select %p14, %s13, 1
      %s16 = smul.addr %s15, 8
      %s17 = scalar_lea.vmem %s0, %s16
      %s18 = sadd.s32 0, 0
      %p19 = scmp.lt.s32.totalorder %s18, 0
      %s20 = scalar_select %p19, %s18, 0
      %s21 = smul.u32 2, %s20
    $region5: #{bce_blur_with_logits_loss.1} parent=1 // pred_fallthru
      _
    // Predicated region
    $region6: #{bce_blur_with_logits_loss.1} parent=1 // pred_check
      _
    $region7: #{bce_blur_with_logits_loss.1} parent=1 // pred_check_branch
      %23 = sbr.rel (0) target = $region9
    $region8: #{bce_blur_with_logits_loss.1} parent=1 // pred_region
      %s24 = sadd.s32 0, 0
      %p25 = scmp.lt.s32.totalorder %s24, 0
      %s26 = scalar_select %p25, %s24, 0
      %s27 = smul.u32 2, %s26
      %p28 = scmp.lt.s32.totalorder %s27, 1
      %s29 = scalar_select %p28, %s27, 1
      %s30 = smul.addr %s29, 8
      %s31 = scalar_lea.vmem %s1, %s30
      %s32 = sadd.s32 0, 0
      %p33 = scmp.lt.s32.totalorder %s32, 0
      %s34 = scalar_select %p33, %s32, 0
      %s35 = smul.u32 2, %s34
    $region9: #{bce_blur_with_logits_loss.1} parent=1 // pred_fallthru
      _
    %s36 = sadd.s32 0, 0
    %p37 = scmp.lt.s32.totalorder %s36, 0
    %s38 = scalar_select %p37, %s36, 0
    %s39 = smul.u32 2, %s38
    %p40 = scmp.lt.s32.totalorder %s39, 1
    %s41 = scalar_select %p40, %s39, 1
    %s42 = smul.addr %s41, 8
    %s43 = scalar_lea.vmem %s0, %s42
    %s44 = sadd.s32 0, 0
    %p45 = scmp.lt.s32.totalorder %s44, 0
    %s46 = scalar_select %p45, %s44, 0
    %s47 = smul.u32 2, %s46
    %p48 = scmp.lt.s32.totalorder %s47, 1
    %s49 = scalar_select %p48, %s47, 1
    %s50 = smul.addr %s49, 8
    %s51 = scalar_lea.vmem %s1, %s50
    %s52 = sadd.s32 0, 0
    %p53 = scmp.lt.s32.totalorder %s52, 0
    %s54 = scalar_select %p53, %s52, 0
    %s55 = smul.u32 2, %s54
    %p56 = scmp.lt.s32.totalorder %s55, 1
    %s57 = scalar_select %p56, %s55, 1
    %s58 = smul.addr %s57, 8
    %s59 = scalar_lea.vmem %s0, %s58
    %s60 = sadd.s32 0, 0
    %p61 = scmp.lt.s32.totalorder %s60, 0
    %s62 = scalar_select %p61, %s60, 0
    %s63 = smul.u32 2, %s62
    %s64 = sadd.s32 0, 0
    %p65 = scmp.lt.s32.totalorder %s64, 0
    %s66 = scalar_select %p65, %s64, 0
    %s67 = smul.u32 2, %s66
    %p68 = scmp.lt.s32.totalorder %s67, 1
    %s69 = scalar_select %p68, %s67, 1
    %s70 = smul.addr %s69, 8
    %s71 = scalar_lea.vmem %s1, %s70
    %s72 = sadd.s32 0, 0
    %p73 = scmp.lt.s32.totalorder %s72, 0
    %s74 = scalar_select %p73, %s72, 0
    %s75 = smul.u32 2, %s74
    %p76 = scmp.eq.s32.totalorder 0, 0
    // Predicated region
    $region10: #{bce_blur_with_logits_loss.1} parent=1 // pred_check
      %p77 = pneg %p76
    $region11: #{bce_blur_with_logits_loss.1} parent=1 // pred_check_branch
      %79 = sbr.rel (%p77) target = $region13
    $region12: #{bce_blur_with_logits_loss.1} parent=1 // pred_region
      %80 = vst [vmem:[#allocation2] sm:$0x1] 0.0
    $region13: #{bce_blur_with_logits_loss.1} parent=1 // pred_fallthru
      _
    %v81 = vld [vmem:[%s59] sm:$0xff]
    %v82 = vld [vmem:[%s59 + $0x8] sm:$0xff]
    %v83 = vld [vmem:[%s71] sm:$0xff]
    %v84 = vld [vmem:[%s71 + $0x8] sm:$0xff]
    %v85 = vand.u32 2147483647, %v81
    %v86 = vand.u32 2147483647, %v82
    %v87 = vsub.f32 0.0, %v85
    %v88 = vsub.f32 0.0, %v86
    %v89 = vmul.f32 %v87, 1.442695
    %v90 = vpow.pop %v89
    %v91 = vmul.f32 %v88, 1.442695
    %v92 = vpow.pop %v91
    %v93 = vadd.f32 %v90, 1.0
    %v94 = vlog2.pop %v93
    %v95 = vmul.f32 %v94, 0.6931472
    %v96 = vmul.f32 -0.5, %v90
    %v97 = vadd.f32 %v96, 1.0
    %v98 = vmul.f32 %v97, %v90
    %v99 = vand.u32 2147483647, %v90
    %vm100 = vcmp.lt.f32.partialorder %v99, 0.0004427343
    %v101 = vsel %vm100, %v98, %v95
    %v102 = vadd.f32 %v92, 1.0
    %v103 = vlog2.pop %v102
    %v104 = vmul.f32 %v103, 0.6931472
    %v105 = vmul.f32 -0.5, %v92
    %v106 = vadd.f32 %v105, 1.0
    %v107 = vmul.f32 %v106, %v92
    %v108 = vand.u32 2147483647, %v92
    %vm109 = vcmp.lt.f32.partialorder %v108, 0.0004427343
    %v110 = vsel %vm109, %v107, %v104
    %v111 = vmax.f32 %v81, 0.0
    %v112 = vmax.f32 %v82, 0.0
    %v113 = vmul.f32 %v81, %v83
    %v114 = vmul.f32 %v82, %v84
    %v115 = vsub.f32 %v111, %v113
    %v116 = vsub.f32 %v112, %v114
    %v117 = vadd.f32 %v115, %v101
    %v118 = vadd.f32 %v116, %v110
    %v119 = vadd.f32 %v90, 1.0
    %v120 = vadd.f32 %v92, 1.0
    %v121 = vrcp.pop %v119
    %v122 = vmul.f32 %v119, %v121
    %v123 = vsub.f32 1.0, %v122
    %v124 = vmul.f32 %v121, %v123
    %v125 = vadd.f32 %v121, %v124
    %vm126 = vweird.f32 %v119
    %vm127 = vweird.f32 %v121
    %vm128 = vmor %vm126, %vm127
    %v129 = vsel %vm128, %v121, %v125
    %v130 = vand.u32 2147483647, %v119
    %vm131 = vcmp.eq.f32.partialorder %v130, 8.507059e+37
    %v132 = vand.u32 %v119, 2147483648
    %v133 = vor.u32 1.1754944e-38, %v132
    %v134 = vsel %vm131, %v133, %v129
    %v135 = vmul.f32 1.0, %v134
    %v136 = vrcp.pop %v120
    %v137 = vmul.f32 %v120, %v136
    %v138 = vsub.f32 1.0, %v137
    %v139 = vmul.f32 %v136, %v138
    %v140 = vadd.f32 %v136, %v139
    %vm141 = vweird.f32 %v120
    %vm142 = vweird.f32 %v136
    %vm143 = vmor %vm141, %vm142
    %v144 = vsel %vm143, %v136, %v140
    %v145 = vand.u32 2147483647, %v120
    %vm146 = vcmp.eq.f32.partialorder %v145, 8.507059e+37
    %v147 = vand.u32 %v120, 2147483648
    %v148 = vor.u32 1.1754944e-38, %v147
    %v149 = vsel %vm146, %v148, %v144
    %v150 = vmul.f32 1.0, %v149
    %vm151 = vcmp.ge.f32.partialorder %v81, 0.0
    %vm152 = vcmp.ge.f32.partialorder %v82, 0.0
    %v153 = vmul.f32 %v90, %v135
    %v154 = vmul.f32 %v92, %v150
    %v155 = vsel %vm151, %v135, %v153
    %v156 = vsel %vm152, %v150, %v154
    %v157 = vsub.f32 %v155, %v83
    %v158 = vsub.f32 %v156, %v84
    %v159 = vsub.f32 %v157, 1.0
    %v160 = vsub.f32 %v158, 1.0
    %v161 = vmul.f32 %v159, 19.96008
    %v162 = vmul.f32 %v160, 19.96008
    %v163 = vmul.f32 %v161, 1.442695
    %v164 = vpow.pop %v163
    %v165 = vmul.f32 %v162, 1.442695
    %v166 = vpow.pop %v165
    %v167 = vsub.f32 1.0, %v164
    %v168 = vsub.f32 1.0, %v166
    %v169 = vmul.f32 %v117, %v167
    %v170 = vmul.f32 %v118, %v168
    %s171 = sadd.s32 0, 0
    %s172 = smul.u32 %s171, 16
    %v173 = vlaneseq
    %v174 = vshrl.u32 %v173, 7
    %v175 = vadd.s32 %v174, 8
    %v176 = vstv %s172
    %v177 = vadd.s32 %v176, %v174
    %v178 = vadd.s32 %v176, %v175
    %vm179 = vcmp.lt.s32.totalorder %v177, 16
    %vm180 = vcmp.lt.s32.totalorder %v178, 16
    %v181 = vsel %vm179, %v169, 0.0
    %v182 = vsel %vm180, %v170, 0.0
    %v183 = vld [vmem:[#allocation2] sm:$0x1]
    %v184 = vadd.f32 %v181, %v182
    %v185 = vrot.slane %v184, 4
    %v186 = vadd.f32 %v184, %v185
    %v187 = vrot.slane %v186, 2
    %v188 = vadd.f32 %v186, %v187
    %v189 = vrot.slane %v188, 1
    %v190 = vadd.f32 %v188, %v189
    %v191 = vadd.f32 %v183, %v190
    %192 = vst [vmem:[#allocation2] sm:$0x1] %v191
    // Predicated region
    $region14: #{bce_blur_with_logits_loss.1} parent=1 // pred_check
      %p193 = pneg %p76
    $region15: #{bce_blur_with_logits_loss.1} parent=1 // pred_check_branch
      %195 = sbr.rel (%p193) target = $region17
    $region16: #{bce_blur_with_logits_loss.1} parent=1 // pred_region
      %v196 = vld [vmem:[#allocation2] sm:$0x1]
      %vm197 = vcmask 1040384
      %v198 = vsel %vm197, %v196, 0.0
      %199 = vadd.xlane.f32.xlu0 %v198
      %v200 = vpop.xlane.xlu0 %199
      %v201 = vrot.slane %v200, 4
      %v202 = vadd.f32 %v200, %v201
      %v203 = vrot.slane %v202, 2
      %v204 = vadd.f32 %v202, %v203
      %v205 = vrot.slane %v204, 1
      %v206 = vadd.f32 %v204, %v205
      %s207 = vtos %v206
      %v208 = vstv %s207
      %vm209 = vcmask 0
      %210 = vst.msk [vmem:[#allocation3] sm:$0x1] %vm209, %v208
    $region17: #{bce_blur_with_logits_loss.1} parent=1 // pred_fallthru
      _
    // Predicated region
    $region18: #{bce_blur_with_logits_loss.1} parent=1 // pred_check
      _
    $region19: #{bce_blur_with_logits_loss.1} parent=1 // pred_check_branch
      %212 = sbr.rel (0) target = $region21
    $region20: #{bce_blur_with_logits_loss.1} parent=1 // pred_region
      %214 = vsyncadd [#allocation4], 0
      %s216 = sshll.u32 [#allocation3], 4
      %s217 = int_to_ptr.vmem [resolvable:$true] %s216
      %s218 = sshll.u32 %s2, 4
      %s219 = int_to_ptr.hbm [resolvable:$true] %s218
      %221 = dma.vmem_to_hbm [thread:$0]  %s217, 16, %s219, [#allocation4]
    $region21: #{bce_blur_with_logits_loss.1} parent=1 // pred_fallthru
      _
    // Predicated region
    $region22: #{bce_blur_with_logits_loss.1} parent=1 // pred_check
      _
    $region23: #{bce_blur_with_logits_loss.1} parent=1 // pred_check_branch
      %223 = sbr.rel (0) target = $region25
    $region24: #{bce_blur_with_logits_loss.1} parent=1 // pred_region
      %225 = dma.done [#allocation4], 16
    $region25: #{bce_blur_with_logits_loss.1} parent=1 // pred_fallthru
      _
    %226 = vsyncpa [#allocation4], 1

</llo_original>
